<compile_context>
chip_gen: v7x
topology: tpu7x:2x2x1
jax: 0.10.0
libtpu: 0.0.40
codegen_flags: <defaults>
</compile_context>

<pallas_src>
import functools
import math

import jax
import jax.numpy as jnp
from jax import lax
from jax.experimental import pallas as pl
from jax.experimental.pallas import tpu as pltpu


def _band_weights(w_hwio, W):
    """(3,3,Ci,Co) HWIO conv weights -> (3, W*Ci, W*Co) banded row matrices.

    band[dh, w_in*Ci + ci, w_out*Co + co] = w[dh, dw, ci, co] with
    w_in = w_out + dw - 1; entries with w_in outside [0, W) are zero, baking the
    horizontal SAME padding into the matrix. One matmul with this matrix performs
    the dw- and channel-contraction for an entire kernel row.
    """
    kh, kw, Ci, Co = w_hwio.shape
    w_in = jnp.arange(W)[None, :, None]
    w_out = jnp.arange(W)[None, None, :]
    dw = jnp.arange(kw)[:, None, None]
    sel = (w_in == w_out + dw - 1).astype(w_hwio.dtype)      # (kw, W, W)
    band = jnp.einsum("dio,adce->aicoe", sel, w_hwio)        # (kh, W, Ci, W, Co)
    return band.reshape(kh, W * Ci, W * Co)


def _pack_stack_weights(band, pack, dtype):
    """(3, K, N) band -> K-stacked, lane-packed (3*pack*K, pack*N) weight matrix.

    kron(I_pack, band[dh]) makes the matrix block-diagonal over the `pack` samples
    sharing the lane axis; reshaping over dh stacks the three kernel rows along K
    so each conv becomes a single MXU matmul against [up | act | dn] lanes.
    """
    kh, K, Nn = band.shape
    eye = jnp.eye(pack, dtype=band.dtype)
    bd = jnp.stack([jnp.kron(eye, band[i]) for i in range(kh)])   # (3, pK, pN)
    return bd.reshape(kh * pack * K, pack * Nn).astype(dtype)


def _resnet_block_kernel(x_ref, g_ref, b_ref, w1_ref, w2_ref, o_ref, *,
                         block1: bool, eps: float, wc_in: int, pack: int):
    """One grid step = `pack` samples packed along the lane axis.

    x_ref  : (1, H, pack*W*Cin)                 packed input samples
    g_ref  : (H, pack*W*Cin)                    LayerNorm gamma (tiled per sample)
    b_ref  : (H, pack*W*Cin)                    LayerNorm beta
    w1_ref : (3*pack*W*Cin,  pack*W*Cout)       K-stacked block-diag band weights
    w2_ref : (3*pack*W*Cout, pack*W*Cout)
    o_ref  : (1, H, pack*W*Cout)                packed output samples
    """
    H, L_in = x_ref.shape[1], x_ref.shape[2]
    x = x_ref[0].astype(jnp.float32)                          # (H, pack*W*Cin)

    # ---- per-sample LayerNorm over (C,H,W); two-pass, masked lane groups ----
    lane = lax.broadcasted_iota(jnp.int32, (H, L_in), 1)
    masks = [
        jnp.logical_and(lane >= p * wc_in, lane < (p + 1) * wc_in).astype(jnp.float32)
        for p in range(pack)
    ]
    inv_n = 1.0 / (H * wc_in)
    mean = jnp.zeros_like(x)
    for m in masks:
        mean = mean + m * (jnp.sum(x * m) * inv_n)
    cent = x - mean
    inv_std = jnp.zeros_like(x)
    for m in masks:
        var = jnp.sum(cent * cent * m) * inv_n                # centered -> stable
        inv_std = inv_std + m * lax.rsqrt(var + eps)
    ln = cent * inv_std * g_ref[...] + b_ref[...]

    def conv3x3(act, w_ref):
        # act: (H, L) f32; w_ref: (3*L, Lo) K-stacked block-diag band matrices.
        # Vertical halo: XLU sublane roll + row mask (no slice/concat copies);
        # horizontal halo + channel contraction + sample packing live in w_ref.
        Hh, L = act.shape
        row = lax.broadcasted_iota(jnp.int32, (Hh, L), 0)
        up = jnp.where(row == 0, 0.0, pltpu.roll(act, shift=1, axis=0))
        dn = jnp.where(row == Hh - 1, 0.0, pltpu.roll(act, shift=Hh - 1, axis=0))
        stacked = jnp.concatenate([up, act, dn], axis=1).astype(w_ref.dtype)
        # Single MXU matmul, K = 3*L (2 passes on the 256-deep v6e/v7x MXU,
        # 3 on v5e's 128-deep MXU); f32 accumulation.
        return jnp.dot(stacked, w_ref[...], preferred_element_type=jnp.float32)

    h1 = conv3x3(ln, w1_ref)
    h1 = h1 * jax.nn.sigmoid(h1)                              # SiLU (f32 VPU/EUP)
    out = conv3x3(h1, w2_ref)
    if block1:
        out = out + x                                         # residual (C == Cout)
    out = out * jax.nn.sigmoid(out)                           # final SiLU
    o_ref[0] = out.astype(o_ref.dtype)                        # 128-lane-dense store


def _tiled_bytes(shape, itemsize):
    """VMEM footprint of one buffer under (8,128) tiling of the last two dims."""
    lead = math.prod(shape[:-2]) if len(shape) > 2 else 1
    sub = -(-shape[-2] // 8) * 8
    lane = -(-shape[-1] // 128) * 128
    return lead * sub * lane * itemsize


def _vmem_capacity_bytes(default=64 << 20):
    try:
        info = pltpu.get_tpu_info()
        return int(getattr(info, "vmem_capacity_bytes", default))
    except Exception:
        return default


def resnet_block(x_nchw, gamma_chw, beta_chw, w1_oihw, w2_oihw, *,
                 block1: bool = True, eps: float = 1e-5,
                 matmul_dtype=jnp.bfloat16):
    """Pallas ResNetBlock forward. Inputs/outputs are NCHW like PyTorch."""
    N, C, H, W = x_nchw.shape
    Cout = w1_oihw.shape[0]
    assert w1_oihw.shape == (Cout, C, 3, 3)
    assert w2_oihw.shape == (Cout, Cout, 3, 3)
    if block1:
        assert C == Cout, "residual path requires in_c == out_c"

    wc_in, wc_out = W * C, W * Cout
    # Lane-packing factor: pack samples side by side so the lane axis reaches 128.
    pack = max(1, min(128 // max(wc_in, wc_out), N))
    Np = -(-N // pack) * pack
    G = Np // pack

    # Layout plumbing (wrapper side only): NCHW -> lane-dense (G, H, pack*W*C).
    # TODO(synk): keep this lane-dense layout across adjacent blocks in a real
    # model instead of converting per call; the transposes here are HBM round trips.
    x_ld = jnp.transpose(x_nchw, (0, 2, 3, 1)).reshape(N, H, wc_in)
    if Np != N:
        x_ld = jnp.concatenate(
            [x_ld, jnp.zeros((Np - N, H, wc_in), x_ld.dtype)], axis=0)
    xp = (x_ld.reshape(G, pack, H, wc_in)
          .transpose(0, 2, 1, 3).reshape(G, H, pack * wc_in))

    g = jnp.tile(jnp.transpose(gamma_chw, (1, 2, 0)).reshape(H, wc_in), (1, pack))
    b = jnp.tile(jnp.transpose(beta_chw, (1, 2, 0)).reshape(H, wc_in), (1, pack))

    # Conv weights -> K-stacked, sample-block-diagonal band matrices (built once).
    # bf16 operands hit the single-pass MXU path on v6e/v7x and halve weight DMA.
    # TODO(synk): for production W/C the band matrices scale as 3*(pack*W*Ci)*(pack*W*Co)
    # with ~3/W nonzeros; switch to a channels-on-lanes layout (H*W rows, C lanes)
    # or a row-blocked grid sized against v7x's 64 MiB VMEM.
    wb1 = _pack_stack_weights(
        _band_weights(jnp.transpose(w1_oihw, (2, 3, 1, 0)), W), pack, matmul_dtype)
    wb2 = _pack_stack_weights(
        _band_weights(jnp.transpose(w2_oihw, (2, 3, 1, 0)), W), pack, matmul_dtype)

    # VMEM budget check (double-buffered pipeline blocks, (8,128) tiling, real
    # itemsizes). Estimate only; gamma/beta/weights have constant index maps so
    # they could be single-buffered (pl.Buffered(1) / one-shot DMA) at large C.
    xib = jnp.dtype(x_nchw.dtype).itemsize
    wib = jnp.dtype(matmul_dtype).itemsize
    vmem_est = 2 * (_tiled_bytes((1, H, pack * wc_in), xib)
                    + 2 * _tiled_bytes((H, pack * wc_in), 4)
                    + _tiled_bytes(wb1.shape, wib) + _tiled_bytes(wb2.shape, wib)
                    + _tiled_bytes((1, H, pack * wc_out), xib))
    vmem_cap = _vmem_capacity_bytes()
    vmem_limit = int(min(max(64 << 20, 4 * vmem_est), (vmem_cap * 3) // 4))
    assert vmem_est < vmem_limit, f"working set {vmem_est} B exceeds VMEM budget"

    out = pl.pallas_call(
        functools.partial(_resnet_block_kernel, block1=block1, eps=eps,
                          wc_in=wc_in, pack=pack),
        out_shape=jax.ShapeDtypeStruct((G, H, pack * wc_out), x_nchw.dtype),
        grid_spec=pltpu.PrefetchScalarGridSpec(
            num_scalar_prefetch=0,
            grid=(G,),                                   # one step per sample group
            in_specs=[
                pl.BlockSpec((1, H, pack * wc_in), lambda n: (n, 0, 0)),
                pl.BlockSpec((H, pack * wc_in), lambda n: (0, 0)),
                pl.BlockSpec((H, pack * wc_in), lambda n: (0, 0)),
                pl.BlockSpec(wb1.shape, lambda n: (0, 0)),
                pl.BlockSpec(wb2.shape, lambda n: (0, 0)),
            ],
            out_specs=pl.BlockSpec((1, H, pack * wc_out), lambda n: (n, 0, 0)),
        ),
        compiler_params=pltpu.CompilerParams(
            dimension_semantics=("parallel",),           # sample groups independent
            vmem_limit_bytes=vmem_limit),
    )(xp, g, b, wb1, wb2)

    # Unpack lanes back to samples and return NCHW for the public API.
    out = (out.reshape(G, H, pack, wc_out).transpose(0, 2, 1, 3)
           .reshape(Np, H, W, Cout)[:N])
    return jnp.transpose(out, (0, 3, 1, 2))


def _reference(x, gamma, beta, w1, w2, block1, eps=1e-5):
    """Pure-JAX reference matching the PyTorch module semantics (NCHW)."""
    mean = jnp.mean(x, axis=(1, 2, 3), keepdims=True)
    var = jnp.mean(jnp.square(x - mean), axis=(1, 2, 3), keepdims=True)
    ln = (x - mean) / jnp.sqrt(var + eps) * gamma[None] + beta[None]

    def conv(inp, w):
        return lax.conv_general_dilated(
            inp, w, window_strides=(1, 1), padding="SAME",
            dimension_numbers=("NCHW", "OIHW", "NCHW"))

    h = conv(ln, w1)
    h = h * jax.nn.sigmoid(h)
    h = conv(h, w2)
    if block1:
        h = h + x
    return h * jax.nn.sigmoid(h)


if __name__ == "__main__":
    N, C, H, W = 2, 4, 16, 16     # in_c == out_c so block1 residual path works
    out_c = 4
    block1 = True

    key = jax.random.PRNGKey(0)
    kx, kg, kb, k1, k2 = jax.random.split(key, 5)

    x = jax.random.normal(kx, (N, C, H, W), jnp.float32)
    gamma = 1.0 + 0.1 * jax.random.normal(kg, (C, H, W), jnp.float32)
    beta = 0.05 * jax.random.normal(kb, (C, H, W), jnp.float32)
    w1 = 0.1 * jax.random.normal(k1, (out_c, C, 3, 3), jnp.float32)
    w2 = 0.1 * jax.random.normal(k2, (out_c, out_c, 3, 3), jnp.float32)

    ref = _reference(x, gamma, beta, w1, w2, block1)

    # Default path: bf16 MXU operands (v6e/v7x fast path), f32 accumulation.
    out = jax.block_until_ready(resnet_block(x, gamma, beta, w1, w2, block1=block1))
    assert out.shape == ref.shape and out.dtype == ref.dtype
    err_bf16 = float(jnp.max(jnp.abs(out - ref)))
    assert jnp.allclose(out, ref, rtol=3e-2, atol=3e-2), f"bf16 max abs err = {err_bf16}"

    # f32 matmul path for tight numerical validation against the reference.
    out32 = jax.block_until_ready(
        resnet_block(x, gamma, beta, w1, w2, block1=block1,
                     matmul_dtype=jnp.float32))
    err_f32 = float(jnp.max(jnp.abs(out32 - ref)))
    assert jnp.allclose(out32, ref, rtol=1e-3, atol=1e-3), f"f32 max abs err = {err_f32}"

    print("KERNEL_OK")
</pallas_src>

<mosaic_0001>
module attributes {stable_mosaic.version = 11 : i64} {
  func.func @_resnet_block_kernel(%arg0: i32, %arg1: memref<1x16x128xf32, #tpu.memory_space<vmem>>, %arg2: memref<16x128xf32, #tpu.memory_space<vmem>>, %arg3: memref<16x128xf32, #tpu.memory_space<vmem>>, %arg4: memref<384x128xbf16, #tpu.memory_space<vmem>>, %arg5: memref<384x128xbf16, #tpu.memory_space<vmem>>, %arg6: memref<1x16x128xf32, #tpu.memory_space<vmem>>) attributes {dimension_semantics = [#tpu.dimension_semantics<parallel>], iteration_bounds = array<i64: 1>, scalar_prefetch = 0 : i64, scratch_operands = 0 : i64, tpu.core_type = #tpu.core_type<tc>, window_params = [{transform_indices = @transform_0, window_bounds = array<i64: 1, 16, 128>}, {pipeline_mode = #tpu.pipeline_mode<synchronous>, transform_indices = @transform_1, window_bounds = array<i64: 16, 128>}, {pipeline_mode = #tpu.pipeline_mode<synchronous>, transform_indices = @transform_2, window_bounds = array<i64: 16, 128>}, {pipeline_mode = #tpu.pipeline_mode<synchronous>, transform_indices = @transform_3, window_bounds = array<i64: 384, 128>}, {pipeline_mode = #tpu.pipeline_mode<synchronous>, transform_indices = @transform_4, window_bounds = array<i64: 384, 128>}, {transform_indices = @transform_5, window_bounds = array<i64: 1, 16, 128>}]} {
    %c0 = arith.constant 0 : index
    %c0_0 = arith.constant 0 : index
    %c0_1 = arith.constant 0 : index
    %0 = vector.load %arg1[%c0, %c0_0, %c0_1] : memref<1x16x128xf32, #tpu.memory_space<vmem>>, vector<1x16x128xf32>
    %1 = vector.shape_cast %0 : vector<1x16x128xf32> to vector<16x128xf32>
    %2 = tpu.iota {dimensions = array<i32: 1>} : vector<16x128xi32>
    %c0_i32 = arith.constant 0 : i32
    %3 = vector.broadcast %c0_i32 : i32 to vector<16x128xi32>
    %4 = arith.cmpi sge, %2, %3 : vector<16x128xi32>
    %c64_i32 = arith.constant 64 : i32
    %5 = vector.broadcast %c64_i32 : i32 to vector<16x128xi32>
    %6 = arith.cmpi slt, %2, %5 : vector<16x128xi32>
    %7 = arith.andi %4, %6 : vector<16x128xi1>
    %8 = arith.extui %7 : vector<16x128xi1> to vector<16x128xi32>
    %9 = arith.sitofp %8 : vector<16x128xi32> to vector<16x128xf32>
    %c64_i32_2 = arith.constant 64 : i32
    %10 = vector.broadcast %c64_i32_2 : i32 to vector<16x128xi32>
    %11 = arith.cmpi sge, %2, %10 : vector<16x128xi32>
    %c128_i32 = arith.constant 128 : i32
    %12 = vector.broadcast %c128_i32 : i32 to vector<16x128xi32>
    %13 = arith.cmpi slt, %2, %12 : vector<16x128xi32>
    %14 = arith.andi %11, %13 : vector<16x128xi1>
    %15 = arith.extui %14 : vector<16x128xi1> to vector<16x128xi32>
    %16 = arith.sitofp %15 : vector<16x128xi32> to vector<16x128xf32>
    %cst = arith.constant 0.000000e+00 : f32
    %17 = vector.broadcast %cst : f32 to vector<16x128xf32>
    %18 = arith.mulf %1, %9 : vector<16x128xf32>
    %19 = vector.shape_cast %18 : vector<16x128xf32> to vector<1x16x128xf32>
    %cst_3 = arith.constant dense<0.000000e+00> : vector<1xf32>
    %20 = vector.multi_reduction <add>, %19, %cst_3 [1, 2] : vector<1x16x128xf32> to vector<1xf32>
    %21 = vector.shape_cast %20 : vector<1xf32> to vector<1x1x1xf32>
    %22 = vector.extract %21[0, 0, 0] : f32 from vector<1x1x1xf32>
    %cst_4 = arith.constant 9.765625E-4 : f32
    %23 = arith.mulf %22, %cst_4 : f32
    %24 = vector.broadcast %23 : f32 to vector<16x128xf32>
    %25 = arith.mulf %9, %24 : vector<16x128xf32>
    %26 = arith.addf %17, %25 : vector<16x128xf32>
    %27 = arith.mulf %1, %16 : vector<16x128xf32>
    %28 = vector.shape_cast %27 : vector<16x128xf32> to vector<1x16x128xf32>
    %cst_5 = arith.constant dense<0.000000e+00> : vector<1xf32>
    %29 = vector.multi_reduction <add>, %28, %cst_5 [1, 2] : vector<1x16x128xf32> to vector<1xf32>
    %30 = vector.shape_cast %29 : vector<1xf32> to vector<1x1x1xf32>
    %31 = vector.extract %30[0, 0, 0] : f32 from vector<1x1x1xf32>
    %cst_6 = arith.constant 9.765625E-4 : f32
    %32 = arith.mulf %31, %cst_6 : f32
    %33 = vector.broadcast %32 : f32 to vector<16x128xf32>
    %34 = arith.mulf %16, %33 : vector<16x128xf32>
    %35 = arith.addf %26, %34 : vector<16x128xf32>
    %36 = arith.subf %1, %35 : vector<16x128xf32>
    %cst_7 = arith.constant 0.000000e+00 : f32
    %37 = vector.broadcast %cst_7 : f32 to vector<16x128xf32>
    %38 = arith.mulf %36, %36 : vector<16x128xf32>
    %39 = arith.mulf %38, %9 : vector<16x128xf32>
    %40 = vector.shape_cast %39 : vector<16x128xf32> to vector<1x16x128xf32>
    %cst_8 = arith.constant dense<0.000000e+00> : vector<1xf32>
    %41 = vector.multi_reduction <add>, %40, %cst_8 [1, 2] : vector<1x16x128xf32> to vector<1xf32>
    %42 = vector.shape_cast %41 : vector<1xf32> to vector<1x1x1xf32>
    %43 = vector.extract %42[0, 0, 0] : f32 from vector<1x1x1xf32>
    %cst_9 = arith.constant 9.765625E-4 : f32
    %44 = arith.mulf %43, %cst_9 : f32
    %cst_10 = arith.constant 9.99999974E-6 : f32
    %45 = arith.addf %44, %cst_10 : f32
    %46 = math.rsqrt %45 : f32
    %47 = vector.broadcast %46 : f32 to vector<16x128xf32>
    %48 = arith.mulf %9, %47 : vector<16x128xf32>
    %49 = arith.addf %37, %48 : vector<16x128xf32>
    %50 = arith.mulf %36, %36 : vector<16x128xf32>
    %51 = arith.mulf %50, %16 : vector<16x128xf32>
    %52 = vector.shape_cast %51 : vector<16x128xf32> to vector<1x16x128xf32>
    %cst_11 = arith.constant dense<0.000000e+00> : vector<1xf32>
    %53 = vector.multi_reduction <add>, %52, %cst_11 [1, 2] : vector<1x16x128xf32> to vector<1xf32>
    %54 = vector.shape_cast %53 : vector<1xf32> to vector<1x1x1xf32>
    %55 = vector.extract %54[0, 0, 0] : f32 from vector<1x1x1xf32>
    %cst_12 = arith.constant 9.765625E-4 : f32
    %56 = arith.mulf %55, %cst_12 : f32
    %cst_13 = arith.constant 9.99999974E-6 : f32
    %57 = arith.addf %56, %cst_13 : f32
    %58 = math.rsqrt %57 : f32
    %59 = vector.broadcast %58 : f32 to vector<16x128xf32>
    %60 = arith.mulf %16, %59 : vector<16x128xf32>
    %61 = arith.addf %49, %60 : vector<16x128xf32>
    %62 = arith.mulf %36, %61 : vector<16x128xf32>
    %c0_14 = arith.constant 0 : index
    %c0_15 = arith.constant 0 : index
    %63 = vector.load %arg2[%c0_14, %c0_15] : memref<16x128xf32, #tpu.memory_space<vmem>>, vector<16x128xf32>
    %64 = arith.mulf %62, %63 : vector<16x128xf32>
    %c0_16 = arith.constant 0 : index
    %c0_17 = arith.constant 0 : index
    %65 = vector.load %arg3[%c0_16, %c0_17] : memref<16x128xf32, #tpu.memory_space<vmem>>, vector<16x128xf32>
    %66 = arith.addf %64, %65 : vector<16x128xf32>
    %67 = tpu.iota {dimensions = array<i32: 0>} : vector<16x128xi32>
    %c0_i32_18 = arith.constant 0 : i32
    %68 = vector.broadcast %c0_i32_18 : i32 to vector<16x128xi32>
    %69 = arith.cmpi eq, %67, %68 : vector<16x128xi32>
    %c1_i32 = arith.constant 1 : i32
    %70 = tpu.dynamic_rotate %66 by %c1_i32 dim 0 : vector<16x128xf32>, i32 -> vector<16x128xf32>
    %cst_19 = arith.constant 0.000000e+00 : f32
    %71 = vector.broadcast %cst_19 : f32 to vector<16x128xf32>
    %72 = arith.select %69, %71, %70 : vector<16x128xi1>, vector<16x128xf32>
    %c15_i32 = arith.constant 15 : i32
    %73 = vector.broadcast %c15_i32 : i32 to vector<16x128xi32>
    %74 = arith.cmpi eq, %67, %73 : vector<16x128xi32>
    %c15_i32_20 = arith.constant 15 : i32
    %75 = tpu.dynamic_rotate %66 by %c15_i32_20 dim 0 : vector<16x128xf32>, i32 -> vector<16x128xf32>
    %cst_21 = arith.constant 0.000000e+00 : f32
    %76 = vector.broadcast %cst_21 : f32 to vector<16x128xf32>
    %77 = arith.select %74, %76, %75 : vector<16x128xi1>, vector<16x128xf32>
    %78 = tpu.concatenate %72, %66, %77 in 1 : vector<16x128xf32>, vector<16x128xf32>, vector<16x128xf32> -> vector<16x384xf32>
    %79 = arith.truncf %78 : vector<16x384xf32> to vector<16x384xbf16>
    %c0_22 = arith.constant 0 : index
    %c0_23 = arith.constant 0 : index
    %80 = vector.load %arg4[%c0_22, %c0_23] : memref<384x128xbf16, #tpu.memory_space<vmem>>, vector<384x128xbf16>
    %cst_24 = arith.constant dense<0.000000e+00> : vector<16x128xf32>
    %81 = tpu.matmul %79, %80, %cst_24 {dimension_numbers = #tpu.dot_dimension_numbers<[1], [0], [0], [1], [0, 0, 1, 1], [], []>} : vector<16x384xbf16>, vector<384x128xbf16>, vector<16x128xf32> -> vector<16x128xf32>
    %82 = arith.negf %81 : vector<16x128xf32>
    %83 = math.exp %82 : vector<16x128xf32>
    %cst_25 = arith.constant 1.000000e+00 : f32
    %84 = vector.broadcast %cst_25 : f32 to vector<16x128xf32>
    %85 = arith.addf %84, %83 : vector<16x128xf32>
    %86 = arith.divf %84, %85 : vector<16x128xf32>
    %87 = arith.mulf %81, %86 : vector<16x128xf32>
    %88 = tpu.iota {dimensions = array<i32: 0>} : vector<16x128xi32>
    %c0_i32_26 = arith.constant 0 : i32
    %89 = vector.broadcast %c0_i32_26 : i32 to vector<16x128xi32>
    %90 = arith.cmpi eq, %88, %89 : vector<16x128xi32>
    %c1_i32_27 = arith.constant 1 : i32
    %91 = tpu.dynamic_rotate %87 by %c1_i32_27 dim 0 : vector<16x128xf32>, i32 -> vector<16x128xf32>
    %cst_28 = arith.constant 0.000000e+00 : f32
    %92 = vector.broadcast %cst_28 : f32 to vector<16x128xf32>
    %93 = arith.select %90, %92, %91 : vector<16x128xi1>, vector<16x128xf32>
    %c15_i32_29 = arith.constant 15 : i32
    %94 = vector.broadcast %c15_i32_29 : i32 to vector<16x128xi32>
    %95 = arith.cmpi eq, %88, %94 : vector<16x128xi32>
    %c15_i32_30 = arith.constant 15 : i32
    %96 = tpu.dynamic_rotate %87 by %c15_i32_30 dim 0 : vector<16x128xf32>, i32 -> vector<16x128xf32>
    %cst_31 = arith.constant 0.000000e+00 : f32
    %97 = vector.broadcast %cst_31 : f32 to vector<16x128xf32>
    %98 = arith.select %95, %97, %96 : vector<16x128xi1>, vector<16x128xf32>
    %99 = tpu.concatenate %93, %87, %98 in 1 : vector<16x128xf32>, vector<16x128xf32>, vector<16x128xf32> -> vector<16x384xf32>
    %100 = arith.truncf %99 : vector<16x384xf32> to vector<16x384xbf16>
    %c0_32 = arith.constant 0 : index
    %c0_33 = arith.constant 0 : index
    %101 = vector.load %arg5[%c0_32, %c0_33] : memref<384x128xbf16, #tpu.memory_space<vmem>>, vector<384x128xbf16>
    %cst_34 = arith.constant dense<0.000000e+00> : vector<16x128xf32>
    %102 = tpu.matmul %100, %101, %cst_34 {dimension_numbers = #tpu.dot_dimension_numbers<[1], [0], [0], [1], [0, 0, 1, 1], [], []>} : vector<16x384xbf16>, vector<384x128xbf16>, vector<16x128xf32> -> vector<16x128xf32>
    %103 = arith.addf %102, %1 : vector<16x128xf32>
    %104 = arith.negf %103 : vector<16x128xf32>
    %105 = math.exp %104 : vector<16x128xf32>
    %cst_35 = arith.constant 1.000000e+00 : f32
    %106 = vector.broadcast %cst_35 : f32 to vector<16x128xf32>
    %107 = arith.addf %106, %105 : vector<16x128xf32>
    %108 = arith.divf %106, %107 : vector<16x128xf32>
    %109 = arith.mulf %103, %108 : vector<16x128xf32>
    %c0_36 = arith.constant 0 : index
    %c0_37 = arith.constant 0 : index
    %c0_38 = arith.constant 0 : index
    %110 = vector.load %arg6[%c0_36, %c0_37, %c0_38] : memref<1x16x128xf32, #tpu.memory_space<vmem>>, vector<1x16x128xf32>
    %111 = vector.shape_cast %110 : vector<1x16x128xf32> to vector<16x128xf32>
    %112 = vector.shape_cast %109 : vector<16x128xf32> to vector<1x16x128xf32>
    tpu.vector_store %arg6[%c0_36, %c0_37, %c0_38], %112 {strides = array<i32>} : memref<1x16x128xf32, #tpu.memory_space<vmem>>, vector<1x16x128xf32>,
    return
  }
  func.func @transform_0(%arg0: i32) -> (i32, i32, i32) {
    %c0_i32 = arith.constant 0 : i32
    %c0_i32_0 = arith.constant 0 : i32
    %c0_i32_1 = arith.constant 0 : i32
    return %arg0, %c0_i32, %c0_i32_0 : i32, i32, i32
  }
  func.func @transform_1(%arg0: i32) -> (i32, i32) {
    %c0_i32 = arith.constant 0 : i32
    %c0_i32_0 = arith.constant 0 : i32
    %c0_i32_1 = arith.constant 0 : i32
    return %c0_i32, %c0_i32_0 : i32, i32
  }
  func.func @transform_2(%arg0: i32) -> (i32, i32) {
    %c0_i32 = arith.constant 0 : i32
    %c0_i32_0 = arith.constant 0 : i32
    %c0_i32_1 = arith.constant 0 : i32
    return %c0_i32, %c0_i32_0 : i32, i32
  }
  func.func @transform_3(%arg0: i32) -> (i32, i32) {
    %c0_i32 = arith.constant 0 : i32
    %c0_i32_0 = arith.constant 0 : i32
    %c0_i32_1 = arith.constant 0 : i32
    return %c0_i32, %c0_i32_0 : i32, i32
  }
  func.func @transform_4(%arg0: i32) -> (i32, i32) {
    %c0_i32 = arith.constant 0 : i32
    %c0_i32_0 = arith.constant 0 : i32
    %c0_i32_1 = arith.constant 0 : i32
    return %c0_i32, %c0_i32_0 : i32, i32
  }
  func.func @transform_5(%arg0: i32) -> (i32, i32, i32) {
    %c0_i32 = arith.constant 0 : i32
    %c0_i32_0 = arith.constant 0 : i32
    %c0_i32_1 = arith.constant 0 : i32
    return %arg0, %c0_i32, %c0_i32_0 : i32, i32, i32
  }
}

</mosaic_0001>

<llo_original>
// kernel: tpu_custom_call.1
$region0: #{tpu_custom_call.1}
  #allocation0 [shape = 'u32[]', space=smem, size = 0x4, offset = 0x4, fixed_abs, tag = 'smem constant byte address 0x4 - core index']
  #allocation1 [shape = 'u32[144,128]{1,0:T(1,128)}', space=vmem, size = 0x12000, scoped, tag = 'internal scratch']
  %s0 = inlined_call_operand.hbm [shape: f32[1,16,128], index: 0, kind: input, shape index: {}]
  %s1 = inlined_call_operand.hbm [shape: f32[16,128], index: 1, kind: input, shape index: {}]
  %s2 = inlined_call_operand.hbm [shape: f32[16,128], index: 2, kind: input, shape index: {}]
  %s3 = inlined_call_operand.hbm [shape: bf16[384,128], index: 3, kind: input, shape index: {}]
  %s4 = inlined_call_operand.hbm [shape: bf16[384,128], index: 4, kind: input, shape index: {}]
  %s5 = inlined_call_operand.hbm [shape: f32[1,16,128], index: 5, kind: output, shape index: {}]
  %s6 = sld [smem:[#allocation0]]
  $region50: #{tpu_custom_call.1} parent=0
    _
  %s8 = ssub.s32 1, %s6
  %s9 = scalar_select 0, %s8, %s6
  $region1: #{tpu_custom_call.1} parent=0
    #allocation2 [shape = 'u8[8192]{0}', space=vmem, size = 0x2000, scoped, tag = 'input window, operand 0, single buffered']
    #allocation3 [shape = 's32[1]{0}', space=sflag, size = 0x4, scoped, tag = 'scoped memory for tpu_custom_call.1']
    #allocation4 [shape = 's32[1]{0}', space=sflag, size = 0x4, scoped, tag = 'scoped memory for tpu_custom_call.1']
    #allocation5 [shape = 'u8[8192]{0}', space=vmem, size = 0x2000, scoped, tag = 'input window, operand 1, single buffered']
    #allocation6 [shape = 's32[1]{0}', space=sflag, size = 0x4, scoped, tag = 'scoped memory for tpu_custom_call.1']
    #allocation7 [shape = 'u8[8192]{0}', space=vmem, size = 0x2000, scoped, tag = 'input window, operand 2, single buffered']
    #allocation8 [shape = 'u8[98304]{0}', space=vmem, size = 0x18000, scoped, tag = 'input window, operand 3, single buffered']
    #allocation9 [shape = 's32[1]{0}', space=sflag, size = 0x4, scoped, tag = 'scoped memory for tpu_custom_call.1']
    #allocation10 [shape = 'u8[98304]{0}', space=vmem, size = 0x18000, scoped, tag = 'input window, operand 4, single buffered']
    #allocation11 [shape = 'u8[8192]{0}', space=vmem, size = 0x2000, scoped, tag = 'output window, operand 0, single buffered']
    %10 = vsyncpa [#allocation3], 0
    %11 = vsyncpa [#allocation6], 0
    %12 = vsyncpa [#allocation9], 0
    %13 = vsyncpa [#allocation4], 0
    // Predicated region
    $region2: #{tpu_custom_call.1} parent=1 // pred_check
      _
    $region3: #{tpu_custom_call.1} parent=1 // pred_check_branch
      %15 = sbr.rel (0) target = $region5
    $region4: #{tpu_custom_call.1} parent=1 // pred_region
      %s17 = ssub.s32 256, 256
      %18 = vsyncadd [#allocation3], %s17
      %s19 = sshll.u32 [#allocation2], 4
      %s20 = int_to_ptr.vmem [resolvable:$true] %s19
      %25 = dma.hbm_to_vmem [thread:$0]  %s0, 256, %s20, [#allocation3], 128, 128, 8
    $region5: #{tpu_custom_call.1} parent=1 // pred_fallthru
      _
    // Predicated region
    $region6: #{tpu_custom_call.1} parent=1 // pred_check
      _
    $region7: #{tpu_custom_call.1} parent=1 // pred_check_branch
      %27 = sbr.rel (0) target = $region9
    $region8: #{tpu_custom_call.1} parent=1 // pred_region
      %s29 = ssub.s32 256, 256
      %30 = vsyncadd [#allocation6], %s29
      %s31 = sshll.u32 [#allocation5], 4
      %s32 = int_to_ptr.vmem [resolvable:$true] %s31
      %37 = dma.hbm_to_vmem [thread:$0]  %s1, 256, %s32, [#allocation6], 128, 128, 8
    $region9: #{tpu_custom_call.1} parent=1 // pred_fallthru
      _
    // Predicated region
    $region10: #{tpu_custom_call.1} parent=1 // pred_check
      _
    $region11: #{tpu_custom_call.1} parent=1 // pred_check_branch
      %39 = sbr.rel (0) target = $region13
    $region12: #{tpu_custom_call.1} parent=1 // pred_region
      %s41 = ssub.s32 256, 256
      %42 = vsyncadd [#allocation6], %s41
      %s43 = sshll.u32 [#allocation7], 4
      %s44 = int_to_ptr.vmem [resolvable:$true] %s43
      %49 = dma.hbm_to_vmem [thread:$0]  %s2, 256, %s44, [#allocation6], 128, 128, 8
    $region13: #{tpu_custom_call.1} parent=1 // pred_fallthru
      _
    // Predicated region
    $region14: #{tpu_custom_call.1} parent=1 // pred_check
      _
    $region15: #{tpu_custom_call.1} parent=1 // pred_check_branch
      %51 = sbr.rel (0) target = $region17
    $region16: #{tpu_custom_call.1} parent=1 // pred_region
      %s53 = ssub.s32 3072, 3072
      %54 = vsyncadd [#allocation9], %s53
      %s55 = sshll.u32 [#allocation8], 4
      %s56 = int_to_ptr.vmem [resolvable:$true] %s55
      %61 = dma.hbm_to_vmem [thread:$0]  %s3, 3072, %s56, [#allocation9], 64, 64, 4
    $region17: #{tpu_custom_call.1} parent=1 // pred_fallthru
      _
    // Predicated region
    $region18: #{tpu_custom_call.1} parent=1 // pred_check
      _
    $region19: #{tpu_custom_call.1} parent=1 // pred_check_branch
      %63 = sbr.rel (0) target = $region21
    $region20: #{tpu_custom_call.1} parent=1 // pred_region
      %s65 = ssub.s32 3072, 3072
      %66 = vsyncadd [#allocation9], %s65
      %s67 = sshll.u32 [#allocation10], 4
      %s68 = int_to_ptr.vmem [resolvable:$true] %s67
      %73 = dma.hbm_to_vmem [thread:$0]  %s4, 3072, %s68, [#allocation9], 64, 64, 4
    $region21: #{tpu_custom_call.1} parent=1 // pred_fallthru
      _
    // Predicated region
    $region22: #{tpu_custom_call.1} parent=1 // pred_check
      _
    $region23: #{tpu_custom_call.1} parent=1 // pred_check_branch
      %75 = sbr.rel (0) target = $region25
    $region24: #{tpu_custom_call.1} parent=1 // pred_region
      %76 = dma.done [#allocation3], 256
    $region25: #{tpu_custom_call.1} parent=1 // pred_fallthru
      _
    // Predicated region
    $region26: #{tpu_custom_call.1} parent=1 // pred_check
      _
    $region27: #{tpu_custom_call.1} parent=1 // pred_check_branch
      %78 = sbr.rel (0) target = $region29
    $region28: #{tpu_custom_call.1} parent=1 // pred_region
      %79 = dma.done [#allocation6], 256
    $region29: #{tpu_custom_call.1} parent=1 // pred_fallthru
      _
    // Predicated region
    $region30: #{tpu_custom_call.1} parent=1 // pred_check
      _
    $region31: #{tpu_custom_call.1} parent=1 // pred_check_branch
      %81 = sbr.rel (0) target = $region33
    $region32: #{tpu_custom_call.1} parent=1 // pred_region
      %82 = dma.done [#allocation6], 256
    $region33: #{tpu_custom_call.1} parent=1 // pred_fallthru
      _
    // Predicated region
    $region34: #{tpu_custom_call.1} parent=1 // pred_check
      _
    $region35: #{tpu_custom_call.1} parent=1 // pred_check_branch
      %84 = sbr.rel (0) target = $region37
    $region36: #{tpu_custom_call.1} parent=1 // pred_region
      %85 = dma.done [#allocation9], 3072
    $region37: #{tpu_custom_call.1} parent=1 // pred_fallthru
      _
    // Predicated region
    $region38: #{tpu_custom_call.1} parent=1 // pred_check
      _
    $region39: #{tpu_custom_call.1} parent=1 // pred_check_branch
      %87 = sbr.rel (0) target = $region41
    $region40: #{tpu_custom_call.1} parent=1 // pred_region
      %88 = dma.done [#allocation9], 3072
    $region41: #{tpu_custom_call.1} parent=1 // pred_fallthru
      _
    %v90 = vld [vmem:[#allocation2] sm:$0xff]
    %v91 = vld [vmem:[#allocation2 + $0x8] sm:$0xff]
    %v92 = vlaneseq
    %v93 = vand.u32 %v92, 127
    %vm94 = vcmp.ge.s32.totalorder %v93, 0
    %vm95 = vcmp.lt.s32.totalorder %v93, 64
    %vm96 = vmand %vm94, %vm95
    %v97 = vsel %vm96, 1, 0
    %v98 = vcvt.s32.f32 %v97
    %vm99 = vcmp.ge.s32.totalorder %v93, 64
    %vm100 = vcmp.lt.s32.totalorder %v93, 128
    %vm101 = vmand %vm99, %vm100
    %v102 = vsel %vm101, 1, 0
    %v103 = vcvt.s32.f32 %v102
    %v104 = vmul.f32 %v90, %v98
    %v105 = vmul.f32 %v91, %v98
    %v106 = vadd.f32 %v104, %v105
    %107 = vadd.xlane.f32.xlu0 %v106
    %v108 = vpop.xlane.xlu0 %107
    %v109 = vrot.slane %v108, 4
    %v110 = vadd.f32 %v108, %v109
    %v111 = vrot.slane %v110, 2
    %v112 = vadd.f32 %v110, %v111
    %v113 = vrot.slane %v112, 1
    %v114 = vadd.f32 %v112, %v113
    %s115 = vtos %v114
    %s116 = smul.f32 %s115, 0.0009765625
    %v117 = vstv %s116
    %v118 = vmul.f32 %v98, %v117
    %v119 = vadd.f32 %v118, 0.0
    %v120 = vmul.f32 %v90, %v103
    %v121 = vmul.f32 %v91, %v103
    %v122 = vadd.f32 %v120, %v121
    %123 = vadd.xlane.f32.xlu0 %v122
    %v124 = vpop.xlane.xlu0 %123
    %v125 = vrot.slane %v124, 4
    %v126 = vadd.f32 %v124, %v125
    %v127 = vrot.slane %v126, 2
    %v128 = vadd.f32 %v126, %v127
    %v129 = vrot.slane %v128, 1
    %v130 = vadd.f32 %v128, %v129
    %s131 = vtos %v130
    %s132 = smul.f32 %s131, 0.0009765625
    %v133 = vstv %s132
    %v134 = vmul.f32 %v103, %v133
    %v135 = vadd.f32 %v119, %v134
    %v136 = vsub.f32 %v90, %v135
    %v137 = vsub.f32 %v91, %v135
    %v138 = vmul.f32 %v136, %v136
    %v139 = vmul.f32 %v137, %v137
    %v140 = vmul.f32 %v138, %v98
    %v141 = vmul.f32 %v139, %v98
    %v142 = vadd.f32 %v140, %v141
    %143 = vadd.xlane.f32.xlu0 %v142
    %v144 = vpop.xlane.xlu0 %143
    %v145 = vrot.slane %v144, 4
    %v146 = vadd.f32 %v144, %v145
    %v147 = vrot.slane %v146, 2
    %v148 = vadd.f32 %v146, %v147
    %v149 = vrot.slane %v148, 1
    %v150 = vadd.f32 %v148, %v149
    %s151 = vtos %v150
    %s152 = smul.f32 %s151, 0.0009765625
    %s153 = sadd.f32 %s152, 1e-05
    %v154 = vstv %s153
    %v155 = vrsqrt.pop %v154
    %s156 = vtos %v155
    %v157 = vstv %s156
    %v158 = vmul.f32 %v98, %v157
    %v159 = vadd.f32 %v158, 0.0
    %v160 = vmul.f32 %v138, %v103
    %v161 = vmul.f32 %v139, %v103
    %v162 = vadd.f32 %v160, %v161
    %163 = vadd.xlane.f32.xlu0 %v162
    %v164 = vpop.xlane.xlu0 %163
    %v165 = vrot.slane %v164, 4
    %v166 = vadd.f32 %v164, %v165
    %v167 = vrot.slane %v166, 2
    %v168 = vadd.f32 %v166, %v167
    %v169 = vrot.slane %v168, 1
    %v170 = vadd.f32 %v168, %v169
    %s171 = vtos %v170
    %s172 = smul.f32 %s171, 0.0009765625
    %s173 = sadd.f32 %s172, 1e-05
    %v174 = vstv %s173
    %v175 = vrsqrt.pop %v174
    %s176 = vtos %v175
    %v177 = vstv %s176
    %v178 = vmul.f32 %v103, %v177
    %v179 = vadd.f32 %v159, %v178
    %v180 = vmul.f32 %v136, %v179
    %v181 = vmul.f32 %v137, %v179
    %v182 = vld [vmem:[#allocation5] sm:$0xff]
    %v183 = vld [vmem:[#allocation5 + $0x8] sm:$0xff]
    %v184 = vmul.f32 %v180, %v182
    %v185 = vmul.f32 %v181, %v183
    %v186 = vld [vmem:[#allocation7] sm:$0xff]
    %v187 = vld [vmem:[#allocation7 + $0x8] sm:$0xff]
    %v188 = vadd.f32 %v184, %v186
    %v189 = vadd.f32 %v185, %v187
    %v190 = vlaneseq
    %v191 = vshrl.u32 %v190, 7
    %v192 = vadd.s32 %v191, 8
    %vm193 = vcmp.eq.s32.totalorder %v191, 0
    %vm194 = vcmp.eq.s32.totalorder %v192, 0
    %v195 = vrot.slane %v188, 7
    %v196 = vrot.slane %v189, 7
    %vm197 = vcmp.lt.s32.totalorder %v191, 1
    %v198 = vsel %vm197, %v195, %v196
    %v199 = vsel %vm197, %v196, %v195
    %v200 = vsel %vm193, 0.0, %v199
    %v201 = vsel %vm194, 0.0, %v198
    %vm202 = vcmp.eq.s32.totalorder %v191, 15
    %vm203 = vcmp.eq.s32.totalorder %v192, 15
    %v204 = vrot.slane %v188, 1
    %v205 = vrot.slane %v189, 1
    %vm206 = vcmp.lt.s32.totalorder %v191, 7
    %v207 = vsel %vm206, %v204, %v205
    %v208 = vsel %vm206, %v205, %v204
    %v209 = vsel %vm202, 0.0, %v207
    %v210 = vsel %vm203, 0.0, %v208
    %v211 = vpack.c.bf16 %v201, %v200
    %v212 = vpack.c.bf16 %v189, %v188
    %v213 = vpack.c.bf16 %v210, %v209
    %v214 = vld [vmem:[#allocation8] sm:$0xf]
    %v215 = vld [vmem:[#allocation8 + $0x4] sm:$0xf]
    %v216 = vld [vmem:[#allocation8 + $0x8] sm:$0xf]
    %v217 = vld [vmem:[#allocation8 + $0xc] sm:$0xf]
    %v218 = vld [vmem:[#allocation8 + $0x10] sm:$0xf]
    %v219 = vld [vmem:[#allocation8 + $0x14] sm:$0xf]
    %v220 = vld [vmem:[#allocation8 + $0x18] sm:$0xf]
    %v221 = vld [vmem:[#allocation8 + $0x1c] sm:$0xf]
    %v222 = vld [vmem:[#allocation8 + $0x20] sm:$0xf]
    %v223 = vld [vmem:[#allocation8 + $0x24] sm:$0xf]
    %v224 = vld [vmem:[#allocation8 + $0x28] sm:$0xf]
    %v225 = vld [vmem:[#allocation8 + $0x2c] sm:$0xf]
    %v226 = vld [vmem:[#allocation8 + $0x30] sm:$0xf]
    %v227 = vld [vmem:[#allocation8 + $0x34] sm:$0xf]
    %v228 = vld [vmem:[#allocation8 + $0x38] sm:$0xf]
    %v229 = vld [vmem:[#allocation8 + $0x3c] sm:$0xf]
    %v230 = vld [vmem:[#allocation8 + $0x40] sm:$0xf]
    %v231 = vld [vmem:[#allocation8 + $0x44] sm:$0xf]
    %v232 = vld [vmem:[#allocation8 + $0x48] sm:$0xf]
    %v233 = vld [vmem:[#allocation8 + $0x4c] sm:$0xf]
    %v234 = vld [vmem:[#allocation8 + $0x50] sm:$0xf]
    %v235 = vld [vmem:[#allocation8 + $0x54] sm:$0xf]
    %v236 = vld [vmem:[#allocation8 + $0x58] sm:$0xf]
    %v237 = vld [vmem:[#allocation8 + $0x5c] sm:$0xf]
    %v238 = vld [vmem:[#allocation8 + $0x60] sm:$0xf]
    %v239 = vld [vmem:[#allocation8 + $0x64] sm:$0xf]
    %v240 = vld [vmem:[#allocation8 + $0x68] sm:$0xf]
    %v241 = vld [vmem:[#allocation8 + $0x6c] sm:$0xf]
    %v242 = vld [vmem:[#allocation8 + $0x70] sm:$0xf]
    %v243 = vld [vmem:[#allocation8 + $0x74] sm:$0xf]
    %v244 = vld [vmem:[#allocation8 + $0x78] sm:$0xf]
    %v245 = vld [vmem:[#allocation8 + $0x7c] sm:$0xf]
    %v246 = vld [vmem:[#allocation8 + $0x80] sm:$0xf]
    %v247 = vld [vmem:[#allocation8 + $0x84] sm:$0xf]
    %v248 = vld [vmem:[#allocation8 + $0x88] sm:$0xf]
    %v249 = vld [vmem:[#allocation8 + $0x8c] sm:$0xf]
    %v250 = vld [vmem:[#allocation8 + $0x90] sm:$0xf]
    %v251 = vld [vmem:[#allocation8 + $0x94] sm:$0xf]
    %v252 = vld [vmem:[#allocation8 + $0x98] sm:$0xf]
    %v253 = vld [vmem:[#allocation8 + $0x9c] sm:$0xf]
    %v254 = vld [vmem:[#allocation8 + $0xa0] sm:$0xf]
    %v255 = vld [vmem:[#allocation8 + $0xa4] sm:$0xf]
    %v256 = vld [vmem:[#allocation8 + $0xa8] sm:$0xf]
    %v257 = vld [vmem:[#allocation8 + $0xac] sm:$0xf]
    %v258 = vld [vmem:[#allocation8 + $0xb0] sm:$0xf]
    %v259 = vld [vmem:[#allocation8 + $0xb4] sm:$0xf]
    %v260 = vld [vmem:[#allocation8 + $0xb8] sm:$0xf]
    %v261 = vld [vmem:[#allocation8 + $0xbc] sm:$0xf]
    %v310 = vunpack.c.l.b16 %v214
    %v311 = vunpack.c.l.b16 %v215
    %v312 = vunpack.c.l.b16 %v216
    %v313 = vunpack.c.l.b16 %v217
    %v314 = vunpack.c.l.b16 %v218
    %v315 = vunpack.c.l.b16 %v219
    %v316 = vunpack.c.l.b16 %v220
    %v317 = vunpack.c.l.b16 %v221
    %v318 = vunpack.c.l.b16 %v222
    %v319 = vunpack.c.l.b16 %v223
    %v320 = vunpack.c.l.b16 %v224
    %v321 = vunpack.c.l.b16 %v225
    %v322 = vunpack.c.l.b16 %v226
    %v323 = vunpack.c.l.b16 %v227
    %v324 = vunpack.c.l.b16 %v228
    %v325 = vunpack.c.l.b16 %v229
    %v326 = vunpack.c.l.b16 %v230
    %v327 = vunpack.c.l.b16 %v231
    %v328 = vunpack.c.l.b16 %v232
    %v329 = vunpack.c.l.b16 %v233
    %v330 = vunpack.c.l.b16 %v234
    %v331 = vunpack.c.l.b16 %v235
    %v332 = vunpack.c.l.b16 %v236
    %v333 = vunpack.c.l.b16 %v237
    %v334 = vunpack.c.l.b16 %v238
    %v335 = vunpack.c.l.b16 %v239
    %v336 = vunpack.c.l.b16 %v240
    %v337 = vunpack.c.l.b16 %v241
    %v338 = vunpack.c.l.b16 %v242
    %v339 = vunpack.c.l.b16 %v243
    %v340 = vunpack.c.l.b16 %v244
    %v341 = vunpack.c.l.b16 %v245
    %v342 = vunpack.c.l.b16 %v246
    %v343 = vunpack.c.l.b16 %v247
    %v344 = vunpack.c.l.b16 %v248
    %v345 = vunpack.c.l.b16 %v249
    %v346 = vunpack.c.l.b16 %v250
    %v347 = vunpack.c.l.b16 %v251
    %v348 = vunpack.c.l.b16 %v252
    %v349 = vunpack.c.l.b16 %v253
    %v350 = vunpack.c.l.b16 %v254
    %v351 = vunpack.c.l.b16 %v255
    %v352 = vunpack.c.l.b16 %v256
    %v353 = vunpack.c.l.b16 %v257
    %v354 = vunpack.c.l.b16 %v258
    %v355 = vunpack.c.l.b16 %v259
    %v356 = vunpack.c.l.b16 %v260
    %v357 = vunpack.c.l.b16 %v261
    %v358 = vpack.c.b16 %v311, %v310
    %v359 = vpack.c.b16 %v313, %v312
    %v360 = vpack.c.b16 %v315, %v314
    %v361 = vpack.c.b16 %v317, %v316
    %v362 = vpack.c.b16 %v319, %v318
    %v363 = vpack.c.b16 %v321, %v320
    %v364 = vpack.c.b16 %v323, %v322
    %v365 = vpack.c.b16 %v325, %v324
    %v366 = vpack.c.b16 %v327, %v326
    %v367 = vpack.c.b16 %v329, %v328
    %v368 = vpack.c.b16 %v331, %v330
    %v369 = vpack.c.b16 %v333, %v332
    %v370 = vpack.c.b16 %v335, %v334
    %v371 = vpack.c.b16 %v337, %v336
    %v372 = vpack.c.b16 %v339, %v338
    %v373 = vpack.c.b16 %v341, %v340
    %v374 = vpack.c.b16 %v343, %v342
    %v375 = vpack.c.b16 %v345, %v344
    %v376 = vpack.c.b16 %v347, %v346
    %v377 = vpack.c.b16 %v349, %v348
    %v378 = vpack.c.b16 %v351, %v350
    %v379 = vpack.c.b16 %v353, %v352
    %v380 = vpack.c.b16 %v355, %v354
    %v381 = vpack.c.b16 %v357, %v356
    %406 = vmatprep.subr.bf16.mxu0 0
    %407 = vmatpush1.bf16.msra.mxu0 %v358
    %408 = vmatprep.subr.bf16.mxu0 0
    %409 = vmatpush1.bf16.msra.mxu0 %v359
    %410 = vmatprep.subr.bf16.mxu0 0
    %411 = vmatpush1.bf16.msra.mxu0 %v360
    %412 = vmatprep.subr.bf16.mxu0 0
    %413 = vmatpush1.bf16.msra.mxu0 %v361
    %414 = vmatprep.subr.bf16.mxu0 0
    %415 = vmatpush1.bf16.msra.mxu0 %v362
    %416 = vmatprep.subr.bf16.mxu0 0
    %417 = vmatpush1.bf16.msra.mxu0 %v363
    %418 = vmatprep.subr.bf16.mxu0 0
    %419 = vmatpush1.bf16.msra.mxu0 %v364
    %420 = vmatprep.subr.bf16.mxu0 0
    %421 = vmatpush1.bf16.msra.mxu0 %v365
    %422 = vmatprep.subr.bf16.mxu0 0
    %423 = vmatpush1.bf16.msra.mxu0 %v366
    %424 = vmatprep.subr.bf16.mxu0 0
    %425 = vmatpush1.bf16.msra.mxu0 %v367
    %426 = vmatprep.subr.bf16.mxu0 0
    %427 = vmatpush1.bf16.msra.mxu0 %v368
    %428 = vmatprep.subr.bf16.mxu0 0
    %429 = vmatpush1.bf16.msra.mxu0 %v369
    %430 = vmatprep.subr.bf16.mxu0 0
    %431 = vmatpush1.bf16.msra.mxu0 %v370
    %432 = vmatprep.subr.bf16.mxu0 0
    %433 = vmatpush1.bf16.msra.mxu0 %v371
    %434 = vmatprep.subr.bf16.mxu0 0
    %435 = vmatpush1.bf16.msra.mxu0 %v372
    %436 = vmatprep.subr.bf16.mxu0 0
    %437 = vmatpush1.bf16.msra.mxu0 %v373
    %438 = vmatprep.mubr.bf16.mxu0 %v212
    %439 = vmatmul.mubr.bf16.gmra.mrb[0].mxu0 %v211
    %v440 = vpop.f32.mrb[0].mxu0
    %v441 = vadd.f32 0.0, %v440
    %v442 = vpop.f32.mrb[0].mxu0
    %v443 = vpop.f32.mrb[0].mxu0
    %v444 = vadd.f32 0.0, %v443
    %v445 = vpop.f32.mrb[0].mxu0
    %446 = vdwg.mxu0
    %447 = vmatprep.subr.bf16.mxu0 0
    %448 = vmatpush1.bf16.msra.mxu0 %v374
    %449 = vmatprep.subr.bf16.mxu0 0
    %450 = vmatpush1.bf16.msra.mxu0 %v375
    %451 = vmatprep.subr.bf16.mxu0 0
    %452 = vmatpush1.bf16.msra.mxu0 %v376
    %453 = vmatprep.subr.bf16.mxu0 0
    %454 = vmatpush1.bf16.msra.mxu0 %v377
    %455 = vmatprep.subr.bf16.mxu0 0
    %456 = vmatpush1.bf16.msra.mxu0 %v378
    %457 = vmatprep.subr.bf16.mxu0 0
    %458 = vmatpush1.bf16.msra.mxu0 %v379
    %459 = vmatprep.subr.bf16.mxu0 0
    %460 = vmatpush1.bf16.msra.mxu0 %v380
    %461 = vmatprep.subr.bf16.mxu0 0
    %462 = vmatpush1.bf16.msra.mxu0 %v381
    %463 = vmatprep.subr.bf16.mxu0 0
    %464 = vmatpush1.bf16.msra.mxu0 0
    %465 = vmatprep.subr.bf16.mxu0 0
    %466 = vmatpush1.bf16.msra.mxu0 0
    %467 = vmatprep.subr.bf16.mxu0 0
    %468 = vmatpush1.bf16.msra.mxu0 0
    %469 = vmatprep.subr.bf16.mxu0 0
    %470 = vmatpush1.bf16.msra.mxu0 0
    %471 = vmatprep.subr.bf16.mxu0 0
    %472 = vmatpush1.bf16.msra.mxu0 0
    %473 = vmatprep.subr.bf16.mxu0 0
    %474 = vmatpush1.bf16.msra.mxu0 0
    %475 = vmatprep.subr.bf16.mxu0 0
    %476 = vmatpush1.bf16.msra.mxu0 0
    %477 = vmatprep.subr.bf16.mxu0 0
    %478 = vmatpush1.bf16.msra.mxu0 0
    %479 = vmatprep.mubr.bf16.mxu0 0
    %480 = vmatmul.mubr.bf16.gmra.mrb[0].mxu0 %v213
    %v481 = vpop.f32.mrb[0].mxu0
    %v482 = vadd.f32 %v441, %v481
    %v483 = vpop.f32.mrb[0].mxu0
    %v484 = vpop.f32.mrb[0].mxu0
    %v485 = vadd.f32 %v444, %v484
    %v486 = vpop.f32.mrb[0].mxu0
    %487 = vdwg.mxu0
    %v488 = vxor.u32 %v482, 2147483648
    %v489 = vxor.u32 %v485, 2147483648
    %v490 = vmul.f32 %v488, 1.442695
    %v491 = vpow.pop %v490
    %v492 = vmul.f32 %v489, 1.442695
    %v493 = vpow.pop %v492
    %v494 = vadd.f32 %v491, 1.0
    %v495 = vadd.f32 %v493, 1.0
    %v496 = vrcp.pop %v494
    %v497 = vmul.f32 1.0, %v496
    %v498 = vrcp.pop %v495
    %v499 = vmul.f32 1.0, %v498
    %v500 = vmul.f32 %v482, %v497
    %v501 = vmul.f32 %v485, %v499
    %v502 = vrot.slane %v500, 7
    %v503 = vrot.slane %v501, 7
    %v504 = vsel %vm197, %v502, %v503
    %v505 = vsel %vm197, %v503, %v502
    %v506 = vsel %vm193, 0.0, %v505
    %v507 = vsel %vm194, 0.0, %v504
    %v508 = vrot.slane %v500, 1
    %v509 = vrot.slane %v501, 1
    %v510 = vsel %vm206, %v508, %v509
    %v511 = vsel %vm206, %v509, %v508
    %v512 = vsel %vm202, 0.0, %v510
    %v513 = vsel %vm203, 0.0, %v511
    %v514 = vpack.c.bf16 %v507, %v506
    %v515 = vpack.c.bf16 %v501, %v500
    %v516 = vpack.c.bf16 %v513, %v512
    %v517 = vld [vmem:[#allocation10] sm:$0xf]
    %v518 = vld [vmem:[#allocation10 + $0x4] sm:$0xf]
    %v519 = vld [vmem:[#allocation10 + $0x8] sm:$0xf]
    %v520 = vld [vmem:[#allocation10 + $0xc] sm:$0xf]
    %v521 = vld [vmem:[#allocation10 + $0x10] sm:$0xf]
    %v522 = vld [vmem:[#allocation10 + $0x14] sm:$0xf]
    %v523 = vld [vmem:[#allocation10 + $0x18] sm:$0xf]
    %v524 = vld [vmem:[#allocation10 + $0x1c] sm:$0xf]
    %v525 = vld [vmem:[#allocation10 + $0x20] sm:$0xf]
    %v526 = vld [vmem:[#allocation10 + $0x24] sm:$0xf]
    %v527 = vld [vmem:[#allocation10 + $0x28] sm:$0xf]
    %v528 = vld [vmem:[#allocation10 + $0x2c] sm:$0xf]
    %v529 = vld [vmem:[#allocation10 + $0x30] sm:$0xf]
    %v530 = vld [vmem:[#allocation10 + $0x34] sm:$0xf]
    %v531 = vld [vmem:[#allocation10 + $0x38] sm:$0xf]
    %v532 = vld [vmem:[#allocation10 + $0x3c] sm:$0xf]
    %v533 = vld [vmem:[#allocation10 + $0x40] sm:$0xf]
    %v534 = vld [vmem:[#allocation10 + $0x44] sm:$0xf]
    %v535 = vld [vmem:[#allocation10 + $0x48] sm:$0xf]
    %v536 = vld [vmem:[#allocation10 + $0x4c] sm:$0xf]
    %v537 = vld [vmem:[#allocation10 + $0x50] sm:$0xf]
    %v538 = vld [vmem:[#allocation10 + $0x54] sm:$0xf]
    %v539 = vld [vmem:[#allocation10 + $0x58] sm:$0xf]
    %v540 = vld [vmem:[#allocation10 + $0x5c] sm:$0xf]
    %v541 = vld [vmem:[#allocation10 + $0x60] sm:$0xf]
    %v542 = vld [vmem:[#allocation10 + $0x64] sm:$0xf]
    %v543 = vld [vmem:[#allocation10 + $0x68] sm:$0xf]
    %v544 = vld [vmem:[#allocation10 + $0x6c] sm:$0xf]
    %v545 = vld [vmem:[#allocation10 + $0x70] sm:$0xf]
    %v546 = vld [vmem:[#allocation10 + $0x74] sm:$0xf]
    %v547 = vld [vmem:[#allocation10 + $0x78] sm:$0xf]
    %v548 = vld [vmem:[#allocation10 + $0x7c] sm:$0xf]
    %v549 = vld [vmem:[#allocation10 + $0x80] sm:$0xf]
    %v550 = vld [vmem:[#allocation10 + $0x84] sm:$0xf]
    %v551 = vld [vmem:[#allocation10 + $0x88] sm:$0xf]
    %v552 = vld [vmem:[#allocation10 + $0x8c] sm:$0xf]
    %v553 = vld [vmem:[#allocation10 + $0x90] sm:$0xf]
    %v554 = vld [vmem:[#allocation10 + $0x94] sm:$0xf]
    %v555 = vld [vmem:[#allocation10 + $0x98] sm:$0xf]
    %v556 = vld [vmem:[#allocation10 + $0x9c] sm:$0xf]
    %v557 = vld [vmem:[#allocation10 + $0xa0] sm:$0xf]
    %v558 = vld [vmem:[#allocation10 + $0xa4] sm:$0xf]
    %v559 = vld [vmem:[#allocation10 + $0xa8] sm:$0xf]
    %v560 = vld [vmem:[#allocation10 + $0xac] sm:$0xf]
    %v561 = vld [vmem:[#allocation10 + $0xb0] sm:$0xf]
    %v562 = vld [vmem:[#allocation10 + $0xb4] sm:$0xf]
    %v563 = vld [vmem:[#allocation10 + $0xb8] sm:$0xf]
    %v564 = vld [vmem:[#allocation10 + $0xbc] sm:$0xf]
    %v613 = vunpack.c.l.b16 %v517
    %v614 = vunpack.c.l.b16 %v518
    %v615 = vunpack.c.l.b16 %v519
    %v616 = vunpack.c.l.b16 %v520
    %v617 = vunpack.c.l.b16 %v521
    %v618 = vunpack.c.l.b16 %v522
    %v619 = vunpack.c.l.b16 %v523
    %v620 = vunpack.c.l.b16 %v524
    %v621 = vunpack.c.l.b16 %v525
    %v622 = vunpack.c.l.b16 %v526
    %v623 = vunpack.c.l.b16 %v527
    %v624 = vunpack.c.l.b16 %v528
    %v625 = vunpack.c.l.b16 %v529
    %v626 = vunpack.c.l.b16 %v530
    %v627 = vunpack.c.l.b16 %v531
    %v628 = vunpack.c.l.b16 %v532
    %v629 = vunpack.c.l.b16 %v533
    %v630 = vunpack.c.l.b16 %v534
    %v631 = vunpack.c.l.b16 %v535
    %v632 = vunpack.c.l.b16 %v536
    %v633 = vunpack.c.l.b16 %v537
    %v634 = vunpack.c.l.b16 %v538
    %v635 = vunpack.c.l.b16 %v539
    %v636 = vunpack.c.l.b16 %v540
    %v637 = vunpack.c.l.b16 %v541
    %v638 = vunpack.c.l.b16 %v542
    %v639 = vunpack.c.l.b16 %v543
    %v640 = vunpack.c.l.b16 %v544
    %v641 = vunpack.c.l.b16 %v545
    %v642 = vunpack.c.l.b16 %v546
    %v643 = vunpack.c.l.b16 %v547
    %v644 = vunpack.c.l.b16 %v548
    %v645 = vunpack.c.l.b16 %v549
    %v646 = vunpack.c.l.b16 %v550
    %v647 = vunpack.c.l.b16 %v551
    %v648 = vunpack.c.l.b16 %v552
    %v649 = vunpack.c.l.b16 %v553
    %v650 = vunpack.c.l.b16 %v554
    %v651 = vunpack.c.l.b16 %v555
    %v652 = vunpack.c.l.b16 %v556
    %v653 = vunpack.c.l.b16 %v557
    %v654 = vunpack.c.l.b16 %v558
    %v655 = vunpack.c.l.b16 %v559
    %v656 = vunpack.c.l.b16 %v560
    %v657 = vunpack.c.l.b16 %v561
    %v658 = vunpack.c.l.b16 %v562
    %v659 = vunpack.c.l.b16 %v563
    %v660 = vunpack.c.l.b16 %v564
    %v661 = vpack.c.b16 %v614, %v613
    %v662 = vpack.c.b16 %v616, %v615
    %v663 = vpack.c.b16 %v618, %v617
    %v664 = vpack.c.b16 %v620, %v619
    %v665 = vpack.c.b16 %v622, %v621
    %v666 = vpack.c.b16 %v624, %v623
    %v667 = vpack.c.b16 %v626, %v625
    %v668 = vpack.c.b16 %v628, %v627
    %v669 = vpack.c.b16 %v630, %v629
    %v670 = vpack.c.b16 %v632, %v631
    %v671 = vpack.c.b16 %v634, %v633
    %v672 = vpack.c.b16 %v636, %v635
    %v673 = vpack.c.b16 %v638, %v637
    %v674 = vpack.c.b16 %v640, %v639
    %v675 = vpack.c.b16 %v642, %v641
    %v676 = vpack.c.b16 %v644, %v643
    %v677 = vpack.c.b16 %v646, %v645
    %v678 = vpack.c.b16 %v648, %v647
    %v679 = vpack.c.b16 %v650, %v649
    %v680 = vpack.c.b16 %v652, %v651
    %v681 = vpack.c.b16 %v654, %v653
    %v682 = vpack.c.b16 %v656, %v655
    %v683 = vpack.c.b16 %v658, %v657
    %v684 = vpack.c.b16 %v660, %v659
    %709 = vmatprep.subr.bf16.mxu0 0
    %710 = vmatpush1.bf16.msra.mxu0 %v661
    %711 = vmatprep.subr.bf16.mxu0 0
    %712 = vmatpush1.bf16.msra.mxu0 %v662
    %713 = vmatprep.subr.bf16.mxu0 0
    %714 = vmatpush1.bf16.msra.mxu0 %v663
    %715 = vmatprep.subr.bf16.mxu0 0
    %716 = vmatpush1.bf16.msra.mxu0 %v664
    %717 = vmatprep.subr.bf16.mxu0 0
    %718 = vmatpush1.bf16.msra.mxu0 %v665
    %719 = vmatprep.subr.bf16.mxu0 0
    %720 = vmatpush1.bf16.msra.mxu0 %v666
    %721 = vmatprep.subr.bf16.mxu0 0
    %722 = vmatpush1.bf16.msra.mxu0 %v667
    %723 = vmatprep.subr.bf16.mxu0 0
    %724 = vmatpush1.bf16.msra.mxu0 %v668
    %725 = vmatprep.subr.bf16.mxu0 0
    %726 = vmatpush1.bf16.msra.mxu0 %v669
    %727 = vmatprep.subr.bf16.mxu0 0
    %728 = vmatpush1.bf16.msra.mxu0 %v670
    %729 = vmatprep.subr.bf16.mxu0 0
    %730 = vmatpush1.bf16.msra.mxu0 %v671
    %731 = vmatprep.subr.bf16.mxu0 0
    %732 = vmatpush1.bf16.msra.mxu0 %v672
    %733 = vmatprep.subr.bf16.mxu0 0
    %734 = vmatpush1.bf16.msra.mxu0 %v673
    %735 = vmatprep.subr.bf16.mxu0 0
    %736 = vmatpush1.bf16.msra.mxu0 %v674
    %737 = vmatprep.subr.bf16.mxu0 0
    %738 = vmatpush1.bf16.msra.mxu0 %v675
    %739 = vmatprep.subr.bf16.mxu0 0
    %740 = vmatpush1.bf16.msra.mxu0 %v676
    %741 = vmatprep.mubr.bf16.mxu0 %v515
    %742 = vmatmul.mubr.bf16.gmra.mrb[0].mxu0 %v514
    %v743 = vpop.f32.mrb[0].mxu0
    %v744 = vadd.f32 %v90, %v743
    %v745 = vpop.f32.mrb[0].mxu0
    %v746 = vpop.f32.mrb[0].mxu0
    %v747 = vadd.f32 %v91, %v746
    %v748 = vpop.f32.mrb[0].mxu0
    %749 = vdwg.mxu0
    %750 = vmatprep.subr.bf16.mxu0 0
    %751 = vmatpush1.bf16.msra.mxu0 %v677
    %752 = vmatprep.subr.bf16.mxu0 0
    %753 = vmatpush1.bf16.msra.mxu0 %v678
    %754 = vmatprep.subr.bf16.mxu0 0
    %755 = vmatpush1.bf16.msra.mxu0 %v679
    %756 = vmatprep.subr.bf16.mxu0 0
    %757 = vmatpush1.bf16.msra.mxu0 %v680
    %758 = vmatprep.subr.bf16.mxu0 0
    %759 = vmatpush1.bf16.msra.mxu0 %v681
    %760 = vmatprep.subr.bf16.mxu0 0
    %761 = vmatpush1.bf16.msra.mxu0 %v682
    %762 = vmatprep.subr.bf16.mxu0 0
    %763 = vmatpush1.bf16.msra.mxu0 %v683
    %764 = vmatprep.subr.bf16.mxu0 0
    %765 = vmatpush1.bf16.msra.mxu0 %v684
    %766 = vmatprep.subr.bf16.mxu0 0
    %767 = vmatpush1.bf16.msra.mxu0 0
    %768 = vmatprep.subr.bf16.mxu0 0
    %769 = vmatpush1.bf16.msra.mxu0 0
    %770 = vmatprep.subr.bf16.mxu0 0
    %771 = vmatpush1.bf16.msra.mxu0 0
    %772 = vmatprep.subr.bf16.mxu0 0
    %773 = vmatpush1.bf16.msra.mxu0 0
    %774 = vmatprep.subr.bf16.mxu0 0
    %775 = vmatpush1.bf16.msra.mxu0 0
    %776 = vmatprep.subr.bf16.mxu0 0
    %777 = vmatpush1.bf16.msra.mxu0 0
    %778 = vmatprep.subr.bf16.mxu0 0
    %779 = vmatpush1.bf16.msra.mxu0 0
    %780 = vmatprep.subr.bf16.mxu0 0
    %781 = vmatpush1.bf16.msra.mxu0 0
    %782 = vmatprep.mubr.bf16.mxu0 0
    %783 = vmatmul.mubr.bf16.gmra.mrb[0].mxu0 %v516
    %v784 = vpop.f32.mrb[0].mxu0
    %v785 = vadd.f32 %v744, %v784
    %v786 = vpop.f32.mrb[0].mxu0
    %v787 = vpop.f32.mrb[0].mxu0
    %v788 = vadd.f32 %v747, %v787
    %v789 = vpop.f32.mrb[0].mxu0
    %790 = vdwg.mxu0
    %v791 = vxor.u32 %v785, 2147483648
    %v792 = vxor.u32 %v788, 2147483648
    %v793 = vmul.f32 %v791, 1.442695
    %v794 = vpow.pop %v793
    %v795 = vmul.f32 %v792, 1.442695
    %v796 = vpow.pop %v795
    %v797 = vadd.f32 %v794, 1.0
    %v798 = vadd.f32 %v796, 1.0
    %v799 = vrcp.pop %v797
    %v800 = vmul.f32 1.0, %v799
    %v801 = vrcp.pop %v798
    %v802 = vmul.f32 1.0, %v801
    %v803 = vmul.f32 %v785, %v800
    %v804 = vmul.f32 %v788, %v802
    %805 = vst [vmem:[#allocation11] sm:$0xff] %v803
    %806 = vst [vmem:[#allocation11 + $0x8] sm:$0xff] %v804
    // Predicated region
    $region42: #{tpu_custom_call.1} parent=1 // pred_check
      _
    $region43: #{tpu_custom_call.1} parent=1 // pred_check_branch
      %808 = sbr.rel (0) target = $region45
    $region44: #{tpu_custom_call.1} parent=1 // pred_region
      %s810 = ssub.s32 256, 256
      %811 = vsyncadd [#allocation4], %s810
      %s812 = sshll.u32 [#allocation11], 4
      %s813 = int_to_ptr.vmem [resolvable:$true] %s812
      %818 = dma.vmem_to_hbm [thread:$0]  %s813, 256, %s5, [#allocation4], 128, 128, 8
    $region45: #{tpu_custom_call.1} parent=1 // pred_fallthru
      _
    // Predicated region
    $region46: #{tpu_custom_call.1} parent=1 // pred_check
      _
    $region47: #{tpu_custom_call.1} parent=1 // pred_check_branch
      %820 = sbr.rel (0) target = $region49
    $region48: #{tpu_custom_call.1} parent=1 // pred_region
      %821 = dma.done [#allocation4], 256
    $region49: #{tpu_custom_call.1} parent=1 // pred_fallthru
      _
    %822 = vsyncpa [#allocation3], 1
    %823 = vsyncpa [#allocation6], 1
    %824 = vsyncpa [#allocation9], 1
    %825 = vsyncpa [#allocation4], 1

</llo_original>
